<compile_context>
chip_gen: v7x
topology: tpu7x:2x2x1
jax: 0.10.0
libtpu: 0.0.40
codegen_flags: <defaults>
</compile_context>

<pallas_src>
import jax
import jax.numpy as jnp
import numpy as np
from jax.experimental import pallas as pl
from jax.experimental.pallas import tpu as pltpu

HIDDEN = 32              # hidden_size
H2 = 2 * HIDDEN          # GRU input size == GRU hidden size == 2*hidden_size (= 64)
VOCAB = 16               # output_size
LANES = 128              # TPU lane width; all kernel operands are padded to this
G3 = 3 * LANES           # packed width of the 3 GRU gates (r, z, n)


def decoder_kernel(ids_ref,                       # SMEM (2*T,) int32, scalar-prefetched token ids
                   gi_lo_ref, gi_hi_ref,          # VMEM (VOCAB, 384) precomputed input projections
                   h0_ref,                        # VMEM (1, 128) initial hidden (zero-padded)
                   whh_ref,                       # VMEM (128, 384) = W_hh^T, gate-padded
                   bhh_ref,                       # VMEM (1, 384) gate-padded
                   wout_ref, bout_ref,            # VMEM (128, 128), (1, 128)
                   logp_ref,                      # VMEM (T, 128) output: lane-dense log-probs
                   hout_ref,                      # VMEM (1, 128) output: final hidden
                   hstate_ref,                    # VMEM (1, 128) scratch: hidden-state carry
                   hseq_ref):                     # VMEM (T, 128) scratch: per-step hidden states
    T = logp_ref.shape[0]
    hstate_ref[...] = h0_ref[...]

    # --- serial recurrence: only h @ W_hh^T sits on the per-step critical path ---
    @pl.loop(0, T)
    def _(t):
        h = hstate_ref[...]                                               # (1, 128); pad lanes are 0
        tok0 = ids_ref[2 * t]
        tok1 = ids_ref[2 * t + 1]
        # Precomputed input projection lookup: gi = 2*[emb0|emb1] @ W_ih^T + b_ih, gate-lane aligned.
        gi = gi_lo_ref[pl.ds(tok0, 1), :] + gi_hi_ref[pl.ds(tok1, 1), :]  # (1, 384)
        gh = jnp.dot(h, whh_ref[...],
                     preferred_element_type=jnp.float32) + bhh_ref[...]   # (1, 384)

        # Each gate lives in its own 128-lane block -> vreg-aligned slices (no lane shifts).
        r = jax.nn.sigmoid(gi[:, 0:LANES] + gh[:, 0:LANES])
        z = jax.nn.sigmoid(gi[:, LANES:2 * LANES] + gh[:, LANES:2 * LANES])
        n = jnp.tanh(gi[:, 2 * LANES:G3] + r * gh[:, 2 * LANES:G3])
        h_new = (1.0 - z) * n + z * h                                     # pad lanes stay exactly 0

        hstate_ref[...] = h_new
        hseq_ref[pl.ds(t, 1), :] = h_new

    # --- batched epilogue: one matmul + one log_softmax over all T rows ---
    hs = hseq_ref[...]                                                    # (T, 128)
    logits = jnp.dot(hs, wout_ref[...],
                     preferred_element_type=jnp.float32) + bout_ref[...]  # (T, 128)
    m = jnp.max(logits, axis=-1, keepdims=True)
    lse = jnp.log(jnp.sum(jnp.exp(logits - m), axis=-1, keepdims=True)) + m
    logp_ref[...] = logits - lse
    hout_ref[...] = hstate_ref[...]


def init_params(key):
    """Parameters in the original PyTorch layout (used by the pure-JAX reference)."""
    ks = jax.random.split(key, 7)
    scale = 0.1
    return {
        "embedding": scale * jax.random.normal(ks[0], (VOCAB, HIDDEN), jnp.float32),
        "w_ih": scale * jax.random.normal(ks[1], (3 * H2, H2), jnp.float32),   # GRU weight_ih_l0
        "w_hh": scale * jax.random.normal(ks[2], (3 * H2, H2), jnp.float32),   # GRU weight_hh_l0
        "b_ih": scale * jax.random.normal(ks[3], (3 * H2,), jnp.float32),
        "b_hh": scale * jax.random.normal(ks[4], (3 * H2,), jnp.float32),
        "w_out": scale * jax.random.normal(ks[5], (VOCAB, H2), jnp.float32),   # see TODO(synk)
        "b_out": scale * jax.random.normal(ks[6], (VOCAB,), jnp.float32),
    }


def pack_params(params):
    """One-time transform of PyTorch-layout params into the 128-lane kernel layout.

    Also hoists the GRU input projection (embedding -> gi) into two (VOCAB, 384) lookup tables,
    folding the 2x input scale, eval-mode dropout identity and b_ih into them.
    """
    hp = jax.lax.Precision.HIGHEST
    emb = params["embedding"]                               # (VOCAB, HIDDEN)
    w_ih = params["w_ih"]                                   # (3*H2, H2)
    gi_lo_raw = 2.0 * jnp.dot(emb, w_ih[:, :HIDDEN].T, precision=hp) + params["b_ih"]  # (VOCAB, 3H2)
    gi_hi_raw = 2.0 * jnp.dot(emb, w_ih[:, HIDDEN:].T, precision=hp)                   # (VOCAB, 3H2)

    def pack_gate_cols(m):
        """(rows, 3*H2) -> (rows, G3): gate g moved into its own 128-lane block."""
        out = jnp.zeros((m.shape[0], G3), jnp.float32)
        for gate in range(3):
            out = out.at[:, gate * LANES:gate * LANES + H2].set(m[:, gate * H2:(gate + 1) * H2])
        return out

    gi_lo = pack_gate_cols(gi_lo_raw)
    gi_hi = pack_gate_cols(gi_hi_raw)

    whh_t = params["w_hh"].T                                # (H2, 3*H2)
    w_hh = jnp.zeros((LANES, G3), jnp.float32)
    for gate in range(3):
        w_hh = w_hh.at[:H2, gate * LANES:gate * LANES + H2].set(whh_t[:, gate * H2:(gate + 1) * H2])

    b_hh = pack_gate_cols(params["b_hh"][None, :])          # (1, G3)

    w_out = jnp.zeros((LANES, LANES), jnp.float32).at[:H2, :VOCAB].set(params["w_out"].T)
    b_out = jnp.full((1, LANES), -1e30, jnp.float32).at[0, :VOCAB].set(params["b_out"])

    return {"gi_lo": gi_lo, "gi_hi": gi_hi, "w_hh": w_hh, "b_hh": b_hh,
            "w_out": w_out, "b_out": b_out}


@jax.jit
def decoder_decode(token_ids, hidden0, packed):
    """Run T decode steps in ONE pallas_call with a single in-kernel loop.

    token_ids: (T, 2) int32 (2 ids per step -> 2*hidden GRU input); hidden0: (1, 1, 2H) f32.
    Returns (log_probs (T, VOCAB), final hidden (1, 1, 2H)).
    """
    T = token_ids.shape[0]
    h0 = jnp.zeros((1, LANES), jnp.float32).at[:, :H2].set(
        hidden0.reshape(1, H2).astype(jnp.float32))

    const = lambda i, ids: (0, 0)          # every operand: one block, VMEM-resident for the whole call
    grid_spec = pltpu.PrefetchScalarGridSpec(
        num_scalar_prefetch=1,
        grid=(1,),
        in_specs=[
            pl.BlockSpec((VOCAB, G3), const),         # gi_lo
            pl.BlockSpec((VOCAB, G3), const),         # gi_hi
            pl.BlockSpec((1, LANES), const),          # h0
            pl.BlockSpec((LANES, G3), const),         # w_hh^T
            pl.BlockSpec((1, G3), const),             # b_hh
            pl.BlockSpec((LANES, LANES), const),      # w_out
            pl.BlockSpec((1, LANES), const),          # b_out
        ],
        out_specs=(
            pl.BlockSpec((T, LANES), const),          # log-probs, all rows written in the epilogue
            pl.BlockSpec((1, LANES), const),          # final hidden
        ),
        scratch_shapes=[
            pltpu.VMEM((1, LANES), jnp.float32),      # hidden-state carry
            pltpu.VMEM((T, LANES), jnp.float32),      # per-step hidden states for batched epilogue
        ],
    )
    logp_pad, h_pad = pl.pallas_call(
        decoder_kernel,
        grid_spec=grid_spec,
        out_shape=(jax.ShapeDtypeStruct((T, LANES), jnp.float32),
                   jax.ShapeDtypeStruct((1, LANES), jnp.float32)),
        compiler_params=pltpu.CompilerParams(dimension_semantics=("arbitrary",)),
    )(token_ids.reshape(-1).astype(jnp.int32),
      packed["gi_lo"], packed["gi_hi"], h0,
      packed["w_hh"], packed["b_hh"], packed["w_out"], packed["b_out"])
    return logp_pad[:, :VOCAB], h_pad[:, :H2].reshape(1, 1, H2)


def decoder_forward(token_ids, hidden, packed):
    """Single decode step == Decoder.forward: token_ids (2,) int32, hidden (1, 1, 2H)."""
    return decoder_decode(token_ids.reshape(1, 2), hidden, packed)


def decoder_reference(token_ids, hidden, params):
    """Pure-JAX reference of the same forward semantics, looped over T steps."""
    hp = jax.lax.Precision.HIGHEST
    h = hidden.reshape(1, H2)
    logps = []
    for t in range(token_ids.shape[0]):
        emb = params["embedding"][token_ids[t]].reshape(1, H2)
        x = 2.0 * emb                                            # dropout (eval) == identity
        gi = jnp.dot(x, params["w_ih"].T, precision=hp) + params["b_ih"]
        gh = jnp.dot(h, params["w_hh"].T, precision=hp) + params["b_hh"]
        i_r, i_z, i_n = gi[:, :H2], gi[:, H2:2 * H2], gi[:, 2 * H2:]
        h_r, h_z, h_n = gh[:, :H2], gh[:, H2:2 * H2], gh[:, 2 * H2:]
        r = jax.nn.sigmoid(i_r + h_r)
        z = jax.nn.sigmoid(i_z + h_z)
        n = jnp.tanh(i_n + r * h_n)
        h = (1.0 - z) * n + z * h
        logits = jnp.dot(h, params["w_out"].T, precision=hp) + params["b_out"]
        logps.append(jax.nn.log_softmax(logits, axis=1))
    return jnp.concatenate(logps, axis=0), h.reshape(1, 1, H2)


if __name__ == "__main__":
    key = jax.random.PRNGKey(0)
    params = init_params(key)
    packed = pack_params(params)

    # --- single step (== Decoder.forward): 2 token ids, hidden = initHidden() ---
    token_ids = jnp.array([3, 7], dtype=jnp.int32)
    hidden = jnp.zeros((1, 1, H2), dtype=jnp.float32)
    logp, h_new = decoder_forward(token_ids, hidden, packed)
    jax.block_until_ready((logp, h_new))
    logp_ref, h_ref = decoder_reference(token_ids[None, :], hidden, params)
    np.testing.assert_allclose(np.asarray(logp), np.asarray(logp_ref), rtol=1e-4, atol=1e-5)
    np.testing.assert_allclose(np.asarray(h_new), np.asarray(h_ref), rtol=1e-4, atol=1e-5)

    # --- T fused decode steps, all inside one kernel invocation ---
    T = 6
    seq_ids = jax.random.randint(jax.random.PRNGKey(1), (T, 2), 0, VOCAB, dtype=jnp.int32)
    logp_seq, h_seq = decoder_decode(seq_ids, hidden, packed)
    jax.block_until_ready((logp_seq, h_seq))
    logp_seq_ref, h_seq_ref = decoder_reference(seq_ids, hidden, params)
    np.testing.assert_allclose(np.asarray(logp_seq), np.asarray(logp_seq_ref), rtol=1e-4, atol=1e-5)
    np.testing.assert_allclose(np.asarray(h_seq), np.asarray(h_seq_ref), rtol=1e-4, atol=1e-5)

    print("KERNEL_OK")
</pallas_src>

<mosaic_0001>
module attributes {stable_mosaic.version = 11 : i64} {
  func.func @decoder_kernel(%arg0: i32, %arg1: memref<2xi32, #tpu.memory_space<smem>>, %arg2: memref<16x384xf32, #tpu.memory_space<vmem>>, %arg3: memref<16x384xf32, #tpu.memory_space<vmem>>, %arg4: memref<1x128xf32, #tpu.memory_space<vmem>>, %arg5: memref<128x384xf32, #tpu.memory_space<vmem>>, %arg6: memref<1x384xf32, #tpu.memory_space<vmem>>, %arg7: memref<128x128xf32, #tpu.memory_space<vmem>>, %arg8: memref<1x128xf32, #tpu.memory_space<vmem>>, %arg9: memref<1x128xf32, #tpu.memory_space<vmem>>, %arg10: memref<1x128xf32, #tpu.memory_space<vmem>>, %arg11: memref<1x128xf32, #tpu.memory_space<vmem>>, %arg12: memref<1x128xf32, #tpu.memory_space<vmem>>) attributes {dimension_semantics = [#tpu.dimension_semantics<arbitrary>], iteration_bounds = array<i64: 1>, scalar_prefetch = 1 : i64, scratch_operands = 2 : i64, tpu.core_type = #tpu.core_type<tc>, window_params = [{pipeline_mode = #tpu.pipeline_mode<synchronous>, transform_indices = @transform_0, window_bounds = array<i64: 16, 384>}, {pipeline_mode = #tpu.pipeline_mode<synchronous>, transform_indices = @transform_1, window_bounds = array<i64: 16, 384>}, {pipeline_mode = #tpu.pipeline_mode<synchronous>, transform_indices = @transform_2, window_bounds = array<i64: 1, 128>}, {pipeline_mode = #tpu.pipeline_mode<synchronous>, transform_indices = @transform_3, window_bounds = array<i64: 128, 384>}, {pipeline_mode = #tpu.pipeline_mode<synchronous>, transform_indices = @transform_4, window_bounds = array<i64: 1, 384>}, {pipeline_mode = #tpu.pipeline_mode<synchronous>, transform_indices = @transform_5, window_bounds = array<i64: 128, 128>}, {pipeline_mode = #tpu.pipeline_mode<synchronous>, transform_indices = @transform_6, window_bounds = array<i64: 1, 128>}, {pipeline_mode = #tpu.pipeline_mode<synchronous>, transform_indices = @transform_7, window_bounds = array<i64: 1, 128>}, {pipeline_mode = #tpu.pipeline_mode<synchronous>, transform_indices = @transform_8, window_bounds = array<i64: 1, 128>}]} {
    %c0 = arith.constant 0 : index
    %c0_0 = arith.constant 0 : index
    %0 = vector.load %arg4[%c0, %c0_0] : memref<1x128xf32, #tpu.memory_space<vmem>>, vector<1x128xf32>
    %c0_1 = arith.constant 0 : index
    %c0_2 = arith.constant 0 : index
    %1 = vector.load %arg11[%c0_1, %c0_2] : memref<1x128xf32, #tpu.memory_space<vmem>>, vector<1x128xf32>
    tpu.vector_store %arg11[%c0_1, %c0_2], %0 {strides = array<i32>} : memref<1x128xf32, #tpu.memory_space<vmem>>, vector<1x128xf32>,
    %c0_i32 = arith.constant 0 : i32
    %c1_i32 = arith.constant 1 : i32
    %2 = arith.muli %c0_i32, %c1_i32 : i32
    %c0_i32_3 = arith.constant 0 : i32
    %3 = arith.addi %c0_i32_3, %2 : i32
    %c0_4 = arith.constant 0 : index
    %c0_5 = arith.constant 0 : index
    %4 = vector.load %arg11[%c0_4, %c0_5] : memref<1x128xf32, #tpu.memory_space<vmem>>, vector<1x128xf32>
    %c2_i32 = arith.constant 2 : i32
    %5 = arith.muli %c2_i32, %3 : i32
    %6 = arith.index_cast %5 : i32 to index
    %7 = memref.load %arg1[%6] : memref<2xi32, #tpu.memory_space<smem>>
    %c2_i32_6 = arith.constant 2 : i32
    %8 = arith.muli %c2_i32_6, %3 : i32
    %c1_i32_7 = arith.constant 1 : i32
    %9 = arith.addi %8, %c1_i32_7 : i32
    %10 = arith.index_cast %9 : i32 to index
    %11 = memref.load %arg1[%10] : memref<2xi32, #tpu.memory_space<smem>>
    %12 = arith.index_cast %7 : i32 to index
    %c0_8 = arith.constant 0 : index
    %13 = vector.load %arg2[%12, %c0_8] : memref<16x384xf32, #tpu.memory_space<vmem>>, vector<1x384xf32>
    %14 = arith.index_cast %11 : i32 to index
    %c0_9 = arith.constant 0 : index
    %15 = vector.load %arg3[%14, %c0_9] : memref<16x384xf32, #tpu.memory_space<vmem>>, vector<1x384xf32>
    %16 = arith.addf %13, %15 : vector<1x384xf32>
    %c0_10 = arith.constant 0 : index
    %c0_11 = arith.constant 0 : index
    %17 = vector.load %arg5[%c0_10, %c0_11] : memref<128x384xf32, #tpu.memory_space<vmem>>, vector<128x384xf32>
    %cst = arith.constant dense<0.000000e+00> : vector<1x384xf32>
    %18 = tpu.matmul %4, %17, %cst {dimension_numbers = #tpu.dot_dimension_numbers<[1], [0], [0], [1], [0, 0, 1, 1], [], []>} : vector<1x128xf32>, vector<128x384xf32>, vector<1x384xf32> -> vector<1x384xf32>
    %c0_12 = arith.constant 0 : index
    %c0_13 = arith.constant 0 : index
    %19 = vector.load %arg6[%c0_12, %c0_13] : memref<1x384xf32, #tpu.memory_space<vmem>>, vector<1x384xf32>
    %20 = arith.addf %18, %19 : vector<1x384xf32>
    %21 = vector.extract_strided_slice %16 {offsets = [0, 0], sizes = [1, 128], strides = [1, 1]} : vector<1x384xf32> to vector<1x128xf32>
    %22 = vector.extract_strided_slice %20 {offsets = [0, 0], sizes = [1, 128], strides = [1, 1]} : vector<1x384xf32> to vector<1x128xf32>
    %23 = arith.addf %21, %22 : vector<1x128xf32>
    %24 = arith.negf %23 : vector<1x128xf32>
    %25 = math.exp %24 : vector<1x128xf32>
    %cst_14 = arith.constant 1.000000e+00 : f32
    %26 = vector.broadcast %cst_14 : f32 to vector<1x128xf32>
    %27 = arith.addf %26, %25 : vector<1x128xf32>
    %28 = arith.divf %26, %27 : vector<1x128xf32>
    %29 = vector.extract_strided_slice %16 {offsets = [0, 128], sizes = [1, 128], strides = [1, 1]} : vector<1x384xf32> to vector<1x128xf32>
    %30 = vector.extract_strided_slice %20 {offsets = [0, 128], sizes = [1, 128], strides = [1, 1]} : vector<1x384xf32> to vector<1x128xf32>
    %31 = arith.addf %29, %30 : vector<1x128xf32>
    %32 = arith.negf %31 : vector<1x128xf32>
    %33 = math.exp %32 : vector<1x128xf32>
    %cst_15 = arith.constant 1.000000e+00 : f32
    %34 = vector.broadcast %cst_15 : f32 to vector<1x128xf32>
    %35 = arith.addf %34, %33 : vector<1x128xf32>
    %36 = arith.divf %34, %35 : vector<1x128xf32>
    %37 = vector.extract_strided_slice %16 {offsets = [0, 256], sizes = [1, 128], strides = [1, 1]} : vector<1x384xf32> to vector<1x128xf32>
    %38 = vector.extract_strided_slice %20 {offsets = [0, 256], sizes = [1, 128], strides = [1, 1]} : vector<1x384xf32> to vector<1x128xf32>
    %39 = arith.mulf %28, %38 : vector<1x128xf32>
    %40 = arith.addf %37, %39 : vector<1x128xf32>
    %41 = math.tanh %40 : vector<1x128xf32>
    %cst_16 = arith.constant 1.000000e+00 : f32
    %42 = vector.broadcast %cst_16 : f32 to vector<1x128xf32>
    %43 = arith.subf %42, %36 : vector<1x128xf32>
    %44 = arith.mulf %43, %41 : vector<1x128xf32>
    %45 = arith.mulf %36, %4 : vector<1x128xf32>
    %46 = arith.addf %44, %45 : vector<1x128xf32>
    %c0_17 = arith.constant 0 : index
    %c0_18 = arith.constant 0 : index
    %47 = vector.load %arg11[%c0_17, %c0_18] : memref<1x128xf32, #tpu.memory_space<vmem>>, vector<1x128xf32>
    tpu.vector_store %arg11[%c0_17, %c0_18], %46 {strides = array<i32>} : memref<1x128xf32, #tpu.memory_space<vmem>>, vector<1x128xf32>,
    %48 = arith.index_cast %3 : i32 to index
    %c0_19 = arith.constant 0 : index
    %49 = vector.load %arg12[%48, %c0_19] : memref<1x128xf32, #tpu.memory_space<vmem>>, vector<1x128xf32>
    tpu.vector_store %arg12[%48, %c0_19], %46 {strides = array<i32>} : memref<1x128xf32, #tpu.memory_space<vmem>>, vector<1x128xf32>,
    %c1_i32_20 = arith.constant 1 : i32
    %c0_21 = arith.constant 0 : index
    %c0_22 = arith.constant 0 : index
    %50 = vector.load %arg12[%c0_21, %c0_22] : memref<1x128xf32, #tpu.memory_space<vmem>>, vector<1x128xf32>
    %c0_23 = arith.constant 0 : index
    %c0_24 = arith.constant 0 : index
    %51 = vector.load %arg7[%c0_23, %c0_24] : memref<128x128xf32, #tpu.memory_space<vmem>>, vector<128x128xf32>
    %cst_25 = arith.constant dense<0.000000e+00> : vector<1x128xf32>
    %52 = tpu.matmul %50, %51, %cst_25 {dimension_numbers = #tpu.dot_dimension_numbers<[1], [0], [0], [1], [0, 0, 1, 1], [], []>} : vector<1x128xf32>, vector<128x128xf32>, vector<1x128xf32> -> vector<1x128xf32>
    %c0_26 = arith.constant 0 : index
    %c0_27 = arith.constant 0 : index
    %53 = vector.load %arg8[%c0_26, %c0_27] : memref<1x128xf32, #tpu.memory_space<vmem>>, vector<1x128xf32>
    %54 = arith.addf %52, %53 : vector<1x128xf32>
    %cst_28 = arith.constant dense<0xFF800000> : vector<1xf32>
    %55 = vector.multi_reduction <maximumf>, %54, %cst_28 [1] : vector<1x128xf32> to vector<1xf32>
    %56 = vector.shape_cast %55 : vector<1xf32> to vector<1x1xf32>
    %57 = vector.broadcast %56 : vector<1x1xf32> to vector<1x128xf32>
    %58 = arith.subf %54, %57 : vector<1x128xf32>
    %59 = math.exp %58 : vector<1x128xf32>
    %cst_29 = arith.constant dense<0.000000e+00> : vector<1xf32>
    %60 = vector.multi_reduction <add>, %59, %cst_29 [1] : vector<1x128xf32> to vector<1xf32>
    %61 = vector.shape_cast %60 : vector<1xf32> to vector<1x1xf32>
    %62 = math.log %61 : vector<1x1xf32>
    %63 = arith.addf %62, %56 : vector<1x1xf32>
    %64 = vector.broadcast %63 : vector<1x1xf32> to vector<1x128xf32>
    %65 = arith.subf %54, %64 : vector<1x128xf32>
    %c0_30 = arith.constant 0 : index
    %c0_31 = arith.constant 0 : index
    %66 = vector.load %arg9[%c0_30, %c0_31] : memref<1x128xf32, #tpu.memory_space<vmem>>, vector<1x128xf32>
    tpu.vector_store %arg9[%c0_30, %c0_31], %65 {strides = array<i32>} : memref<1x128xf32, #tpu.memory_space<vmem>>, vector<1x128xf32>,
    %c0_32 = arith.constant 0 : index
    %c0_33 = arith.constant 0 : index
    %67 = vector.load %arg11[%c0_32, %c0_33] : memref<1x128xf32, #tpu.memory_space<vmem>>, vector<1x128xf32>
    %c0_34 = arith.constant 0 : index
    %c0_35 = arith.constant 0 : index
    %68 = vector.load %arg10[%c0_34, %c0_35] : memref<1x128xf32, #tpu.memory_space<vmem>>, vector<1x128xf32>
    tpu.vector_store %arg10[%c0_34, %c0_35], %67 {strides = array<i32>} : memref<1x128xf32, #tpu.memory_space<vmem>>, vector<1x128xf32>,
    return
  }
  func.func @transform_0(%arg0: i32, %arg1: memref<2xi32, #tpu.memory_space<smem>>) -> (i32, i32) {
    %c0_i32 = arith.constant 0 : i32
    %c0_i32_0 = arith.constant 0 : i32
    %c0_i32_1 = arith.constant 0 : i32
    return %c0_i32, %c0_i32_0 : i32, i32
  }
  func.func @transform_1(%arg0: i32, %arg1: memref<2xi32, #tpu.memory_space<smem>>) -> (i32, i32) {
    %c0_i32 = arith.constant 0 : i32
    %c0_i32_0 = arith.constant 0 : i32
    %c0_i32_1 = arith.constant 0 : i32
    return %c0_i32, %c0_i32_0 : i32, i32
  }
  func.func @transform_2(%arg0: i32, %arg1: memref<2xi32, #tpu.memory_space<smem>>) -> (i32, i32) {
    %c0_i32 = arith.constant 0 : i32
    %c0_i32_0 = arith.constant 0 : i32
    %c0_i32_1 = arith.constant 0 : i32
    return %c0_i32, %c0_i32_0 : i32, i32
  }
  func.func @transform_3(%arg0: i32, %arg1: memref<2xi32, #tpu.memory_space<smem>>) -> (i32, i32) {
    %c0_i32 = arith.constant 0 : i32
    %c0_i32_0 = arith.constant 0 : i32
    %c0_i32_1 = arith.constant 0 : i32
    return %c0_i32, %c0_i32_0 : i32, i32
  }
  func.func @transform_4(%arg0: i32, %arg1: memref<2xi32, #tpu.memory_space<smem>>) -> (i32, i32) {
    %c0_i32 = arith.constant 0 : i32
    %c0_i32_0 = arith.constant 0 : i32
    %c0_i32_1 = arith.constant 0 : i32
    return %c0_i32, %c0_i32_0 : i32, i32
  }
  func.func @transform_5(%arg0: i32, %arg1: memref<2xi32, #tpu.memory_space<smem>>) -> (i32, i32) {
    %c0_i32 = arith.constant 0 : i32
    %c0_i32_0 = arith.constant 0 : i32
    %c0_i32_1 = arith.constant 0 : i32
    return %c0_i32, %c0_i32_0 : i32, i32
  }
  func.func @transform_6(%arg0: i32, %arg1: memref<2xi32, #tpu.memory_space<smem>>) -> (i32, i32) {
    %c0_i32 = arith.constant 0 : i32
    %c0_i32_0 = arith.constant 0 : i32
    %c0_i32_1 = arith.constant 0 : i32
    return %c0_i32, %c0_i32_0 : i32, i32
  }
  func.func @transform_7(%arg0: i32, %arg1: memref<2xi32, #tpu.memory_space<smem>>) -> (i32, i32) {
    %c0_i32 = arith.constant 0 : i32
    %c0_i32_0 = arith.constant 0 : i32
    %c0_i32_1 = arith.constant 0 : i32
    return %c0_i32, %c0_i32_0 : i32, i32
  }
  func.func @transform_8(%arg0: i32, %arg1: memref<2xi32, #tpu.memory_space<smem>>) -> (i32, i32) {
    %c0_i32 = arith.constant 0 : i32
    %c0_i32_0 = arith.constant 0 : i32
    %c0_i32_1 = arith.constant 0 : i32
    return %c0_i32, %c0_i32_0 : i32, i32
  }
}

</mosaic_0001>

<llo_original>
// kernel: decoder_decode.1
$region0: #{decoder_decode.1}
  #allocation0 [shape = 'u32[]', space=smem, size = 0x4, offset = 0x4, fixed_abs, tag = 'smem constant byte address 0x4 - core index']
  #allocation1 [shape = 'u32[144,128]{1,0:T(1,128)}', space=vmem, size = 0x12000, scoped, tag = 'internal scratch']
  #allocation2 [shape = 'f32[1,128]{1,0:T(1,128)}', space=vmem, size = 0x200, scoped, tag = 'scratch operand']
  #allocation3 [shape = 'f32[1,128]{1,0:T(1,128)}', space=vmem, size = 0x200, scoped, tag = 'scratch operand']
  #allocation4 [shape = 's32[1]{0}', space=sflag, size = 0x4, scoped, tag = 'scoped memory for decoder_decode.1']
  #allocation5 [shape = 'u8[512]{0}', space=smem, size = 0x200, scoped, tag = 'prefetched SMEM operand 0']
  %s0 = inlined_call_operand.vmem [shape: s32[2], index: 0, kind: input, shape index: {}]
  %s1 = inlined_call_operand.hbm [shape: f32[16,384], index: 1, kind: input, shape index: {}]
  %s2 = inlined_call_operand.hbm [shape: f32[16,384], index: 2, kind: input, shape index: {}]
  %s3 = inlined_call_operand.vmem [shape: f32[1,128], index: 3, kind: input, shape index: {}]
  %s4 = inlined_call_operand.hbm [shape: f32[128,384], index: 4, kind: input, shape index: {}]
  %s5 = inlined_call_operand.vmem [shape: f32[1,384], index: 5, kind: input, shape index: {}]
  %s6 = inlined_call_operand.hbm [shape: f32[128,128], index: 6, kind: input, shape index: {}]
  %s7 = inlined_call_operand.vmem [shape: f32[1,128], index: 7, kind: input, shape index: {}]
  %s8 = inlined_call_operand.hbm [shape: f32[1,128], index: 8, kind: output, shape index: {0}]
  %s9 = inlined_call_operand.vmem [shape: f32[1,128], index: 9, kind: output, shape index: {1}]
  %10 = xla_tuple %s8, %s9
  %s11 = sld [smem:[#allocation0]]
  $region62: #{decoder_decode.1} parent=0
    _
  %s13 = ssub.s32 1, %s11
  %s14 = scalar_select 0, %s13, %s11
  %s15 = sshll.u32 %s0, 4
  %s16 = int_to_ptr.vmem [resolvable:$true] %s15
  %18 = dma.vmem_to_smem %s16, 16, [#allocation5], [#allocation4]
  %19 = dma.done [#allocation4], 16
  %20 = sfence
  $region1: #{decoder_decode.1} parent=0
    #allocation6 [shape = 'u8[24576]{0}', space=vmem, size = 0x6000, scoped, tag = 'input window, operand 1, single buffered']
    #allocation7 [shape = 's32[1]{0}', space=sflag, size = 0x4, scoped, tag = 'scoped memory for decoder_decode.1']
    #allocation8 [shape = 's32[1]{0}', space=sflag, size = 0x4, scoped, tag = 'scoped memory for decoder_decode.1']
    #allocation9 [shape = 'u8[24576]{0}', space=vmem, size = 0x6000, scoped, tag = 'input window, operand 2, single buffered']
    #allocation10 [shape = 's32[1]{0}', space=sflag, size = 0x4, scoped, tag = 'scoped memory for decoder_decode.1']
    #allocation11 [shape = 'u8[196608]{0}', space=vmem, size = 0x30000, scoped, tag = 'input window, operand 4, single buffered']
    #allocation12 [shape = 'u8[65536]{0}', space=vmem, size = 0x10000, scoped, tag = 'input window, operand 6, single buffered']
    #allocation13 [shape = 's32[1]{0}', space=sflag, size = 0x4, scoped, tag = 'scoped memory for decoder_decode.1']
    #allocation14 [shape = 'u8[512]{0}', space=vmem, size = 0x400, scoped, tag = 'output window, operand 0, single buffered']
    %21 = vsyncpa [#allocation7], 0
    %22 = vsyncpa [#allocation10], 0
    %23 = vsyncpa [#allocation13], 0
    %24 = vsyncpa [#allocation8], 0
    // Predicated region
    $region2: #{decoder_decode.1} parent=1 // pred_check
      _
    $region3: #{decoder_decode.1} parent=1 // pred_check_branch
      %26 = sbr.rel (0) target = $region5
    $region4: #{decoder_decode.1} parent=1 // pred_region
      %s28 = ssub.s32 768, 768
      %29 = vsyncadd [#allocation7], %s28
      %s30 = sshll.u32 [#allocation6], 4
      %s31 = int_to_ptr.vmem [resolvable:$true] %s30
      %36 = dma.hbm_to_vmem [thread:$0]  %s1, 768, %s31, [#allocation7], 384, 384, 24
    $region5: #{decoder_decode.1} parent=1 // pred_fallthru
      _
    // Predicated region
    $region6: #{decoder_decode.1} parent=1 // pred_check
      _
    $region7: #{decoder_decode.1} parent=1 // pred_check_branch
      %38 = sbr.rel (0) target = $region9
    $region8: #{decoder_decode.1} parent=1 // pred_region
      %s40 = ssub.s32 768, 768
      %41 = vsyncadd [#allocation10], %s40
      %s42 = sshll.u32 [#allocation9], 4
      %s43 = int_to_ptr.vmem [resolvable:$true] %s42
      %48 = dma.hbm_to_vmem [thread:$0]  %s2, 768, %s43, [#allocation10], 384, 384, 24
    $region9: #{decoder_decode.1} parent=1 // pred_fallthru
      _
    // Predicated region
    $region10: #{decoder_decode.1} parent=1 // pred_check
      _
    $region11: #{decoder_decode.1} parent=1 // pred_check_branch
      %50 = sbr.rel (0) target = $region13
    $region12: #{decoder_decode.1} parent=1 // pred_region
      _
    $region13: #{decoder_decode.1} parent=1 // pred_fallthru
      _
    // Predicated region
    $region14: #{decoder_decode.1} parent=1 // pred_check
      _
    $region15: #{decoder_decode.1} parent=1 // pred_check_branch
      %52 = sbr.rel (0) target = $region17
    $region16: #{decoder_decode.1} parent=1 // pred_region
      %s54 = ssub.s32 6144, 6144
      %55 = vsyncadd [#allocation10], %s54
      %s56 = sshll.u32 [#allocation11], 4
      %s57 = int_to_ptr.vmem [resolvable:$true] %s56
      %62 = dma.hbm_to_vmem [thread:$0]  %s4, 6144, %s57, [#allocation10], 384, 384, 24
    $region17: #{decoder_decode.1} parent=1 // pred_fallthru
      _
    // Predicated region
    $region18: #{decoder_decode.1} parent=1 // pred_check
      _
    $region19: #{decoder_decode.1} parent=1 // pred_check_branch
      %64 = sbr.rel (0) target = $region21
    $region20: #{decoder_decode.1} parent=1 // pred_region
      _
    $region21: #{decoder_decode.1} parent=1 // pred_fallthru
      _
    // Predicated region
    $region22: #{decoder_decode.1} parent=1 // pred_check
      _
    $region23: #{decoder_decode.1} parent=1 // pred_check_branch
      %66 = sbr.rel (0) target = $region25
    $region24: #{decoder_decode.1} parent=1 // pred_region
      %s68 = ssub.s32 2048, 2048
      %69 = vsyncadd [#allocation13], %s68
      %s70 = sshll.u32 [#allocation12], 4
      %s71 = int_to_ptr.vmem [resolvable:$true] %s70
      %76 = dma.hbm_to_vmem [thread:$0]  %s6, 2048, %s71, [#allocation13], 128, 128, 8
    $region25: #{decoder_decode.1} parent=1 // pred_fallthru
      _
    // Predicated region
    $region26: #{decoder_decode.1} parent=1 // pred_check
      _
    $region27: #{decoder_decode.1} parent=1 // pred_check_branch
      %78 = sbr.rel (0) target = $region29
    $region28: #{decoder_decode.1} parent=1 // pred_region
      _
    $region29: #{decoder_decode.1} parent=1 // pred_fallthru
      _
    // Predicated region
    $region30: #{decoder_decode.1} parent=1 // pred_check
      _
    $region31: #{decoder_decode.1} parent=1 // pred_check_branch
      %80 = sbr.rel (0) target = $region33
    $region32: #{decoder_decode.1} parent=1 // pred_region
      %81 = dma.done [#allocation7], 768
    $region33: #{decoder_decode.1} parent=1 // pred_fallthru
      _
    // Predicated region
    $region34: #{decoder_decode.1} parent=1 // pred_check
      _
    $region35: #{decoder_decode.1} parent=1 // pred_check_branch
      %83 = sbr.rel (0) target = $region37
    $region36: #{decoder_decode.1} parent=1 // pred_region
      %84 = dma.done [#allocation10], 768
    $region37: #{decoder_decode.1} parent=1 // pred_fallthru
      _
    // Predicated region
    $region38: #{decoder_decode.1} parent=1 // pred_check
      _
    $region39: #{decoder_decode.1} parent=1 // pred_check_branch
      %86 = sbr.rel (0) target = $region41
    $region40: #{decoder_decode.1} parent=1 // pred_region
      %87 = dma.done [#allocation10], 6144
    $region41: #{decoder_decode.1} parent=1 // pred_fallthru
      _
    // Predicated region
    $region42: #{decoder_decode.1} parent=1 // pred_check
      _
    $region43: #{decoder_decode.1} parent=1 // pred_check_branch
      %89 = sbr.rel (0) target = $region45
    $region44: #{decoder_decode.1} parent=1 // pred_region
      %90 = dma.done [#allocation13], 2048
    $region45: #{decoder_decode.1} parent=1 // pred_fallthru
      _
    %v91 = vld [vmem:[%s3] sm:$0x1]
    %92 = vst [vmem:[#allocation2] sm:$0x1] %v91
    %v93 = vld [vmem:[#allocation2] sm:$0x1]
    %s94 = sld [smem:[#allocation5]]
    %s95 = sld [smem:[#allocation5 + $0x1]]
    %s96 = sshra.s32 %s94, 3
    %s97 = sand.u32 %s94, 7
    %s98 = sshra.s32 %s94, 3
    %s99 = sand.u32 %s94, 7
    %s100 = smul.u32 %s96, 3
    %s101 = smul.u32 %s100, 8
    %s102 = sadd.s32 %s101, %s99
    %s103 = scalar_lea.vmem [#allocation6], %s102
    %v104 = vld [vmem:[%s103] ss:$8 sm:$0x7]
    %s105 = sshra.s32 %s95, 3
    %s106 = sand.u32 %s95, 7
    %s107 = sshra.s32 %s95, 3
    %s108 = sand.u32 %s95, 7
    %s109 = smul.u32 %s105, 3
    %s110 = smul.u32 %s109, 8
    %s111 = sadd.s32 %s110, %s108
    %s112 = scalar_lea.vmem [#allocation9], %s111
    %v113 = vld [vmem:[%s112] ss:$8 sm:$0x7]
    %v114 = vadd.f32 %v104, %v113
    %v115 = vld [vmem:[#allocation11] sm:$0xff]
    %v116 = vld [vmem:[#allocation11 + $0x8] sm:$0xff]
    %v117 = vld [vmem:[#allocation11 + $0x10] sm:$0xff]
    %v118 = vld [vmem:[#allocation11 + $0x18] sm:$0xff]
    %v119 = vld [vmem:[#allocation11 + $0x20] sm:$0xff]
    %v120 = vld [vmem:[#allocation11 + $0x28] sm:$0xff]
    %v121 = vld [vmem:[#allocation11 + $0x30] sm:$0xff]
    %v122 = vld [vmem:[#allocation11 + $0x38] sm:$0xff]
    %v123 = vld [vmem:[#allocation11 + $0x40] sm:$0xff]
    %v124 = vld [vmem:[#allocation11 + $0x48] sm:$0xff]
    %v125 = vld [vmem:[#allocation11 + $0x50] sm:$0xff]
    %v126 = vld [vmem:[#allocation11 + $0x58] sm:$0xff]
    %v127 = vld [vmem:[#allocation11 + $0x60] sm:$0xff]
    %v128 = vld [vmem:[#allocation11 + $0x68] sm:$0xff]
    %v129 = vld [vmem:[#allocation11 + $0x70] sm:$0xff]
    %v130 = vld [vmem:[#allocation11 + $0x78] sm:$0xff]
    %v131 = vld [vmem:[#allocation11 + $0x80] sm:$0xff]
    %v132 = vld [vmem:[#allocation11 + $0x88] sm:$0xff]
    %v133 = vld [vmem:[#allocation11 + $0x90] sm:$0xff]
    %v134 = vld [vmem:[#allocation11 + $0x98] sm:$0xff]
    %v135 = vld [vmem:[#allocation11 + $0xa0] sm:$0xff]
    %v136 = vld [vmem:[#allocation11 + $0xa8] sm:$0xff]
    %v137 = vld [vmem:[#allocation11 + $0xb0] sm:$0xff]
    %v138 = vld [vmem:[#allocation11 + $0xb8] sm:$0xff]
    %v139 = vld [vmem:[#allocation11 + $0xc0] sm:$0xff]
    %v140 = vld [vmem:[#allocation11 + $0xc8] sm:$0xff]
    %v141 = vld [vmem:[#allocation11 + $0xd0] sm:$0xff]
    %v142 = vld [vmem:[#allocation11 + $0xd8] sm:$0xff]
    %v143 = vld [vmem:[#allocation11 + $0xe0] sm:$0xff]
    %v144 = vld [vmem:[#allocation11 + $0xe8] sm:$0xff]
    %v145 = vld [vmem:[#allocation11 + $0xf0] sm:$0xff]
    %v146 = vld [vmem:[#allocation11 + $0xf8] sm:$0xff]
    %v147 = vld [vmem:[#allocation11 + $0x100] sm:$0xff]
    %v148 = vld [vmem:[#allocation11 + $0x108] sm:$0xff]
    %v149 = vld [vmem:[#allocation11 + $0x110] sm:$0xff]
    %v150 = vld [vmem:[#allocation11 + $0x118] sm:$0xff]
    %v151 = vld [vmem:[#allocation11 + $0x120] sm:$0xff]
    %v152 = vld [vmem:[#allocation11 + $0x128] sm:$0xff]
    %v153 = vld [vmem:[#allocation11 + $0x130] sm:$0xff]
    %v154 = vld [vmem:[#allocation11 + $0x138] sm:$0xff]
    %v155 = vld [vmem:[#allocation11 + $0x140] sm:$0xff]
    %v156 = vld [vmem:[#allocation11 + $0x148] sm:$0xff]
    %v157 = vld [vmem:[#allocation11 + $0x150] sm:$0xff]
    %v158 = vld [vmem:[#allocation11 + $0x158] sm:$0xff]
    %v159 = vld [vmem:[#allocation11 + $0x160] sm:$0xff]
    %v160 = vld [vmem:[#allocation11 + $0x168] sm:$0xff]
    %v161 = vld [vmem:[#allocation11 + $0x170] sm:$0xff]
    %v162 = vld [vmem:[#allocation11 + $0x178] sm:$0xff]
    %v163 = vld [vmem:[%s5] sm:$0x7]
    %v165 = vlaneseq
    %v166 = vshrl.u32 %v165, 7
    %v167 = vsub.s32 0, %v166
    %v168 = vrot.slane %v163, %v167
    %v169 = vlaneseq
    %v170 = vshrl.u32 %v169, 7
    %v171 = vsub.s32 1, %v170
    %v172 = vrot.slane %v163, %v171
    %v173 = vlaneseq
    %v174 = vshrl.u32 %v173, 7
    %v175 = vsub.s32 2, %v174
    %v176 = vrot.slane %v163, %v175
    %180 = vmatprep.subr.mxu0 %v116
    %181 = vmatpush1.msra.mxu0 %v115
    %182 = vmatprep.subr.mxu0 %v119
    %183 = vmatpush1.msra.mxu0 %v118
    %184 = vmatprep.subr.mxu0 %v122
    %185 = vmatpush1.msra.mxu0 %v121
    %186 = vmatprep.subr.mxu0 %v125
    %187 = vmatpush1.msra.mxu0 %v124
    %188 = vmatprep.subr.mxu0 %v128
    %189 = vmatpush1.msra.mxu0 %v127
    %190 = vmatprep.subr.mxu0 %v131
    %191 = vmatpush1.msra.mxu0 %v130
    %192 = vmatprep.subr.mxu0 %v134
    %193 = vmatpush1.msra.mxu0 %v133
    %194 = vmatprep.subr.mxu0 %v137
    %195 = vmatpush1.msra.mxu0 %v136
    %196 = vmatprep.subr.mxu0 %v140
    %197 = vmatpush1.msra.mxu0 %v139
    %198 = vmatprep.subr.mxu0 %v143
    %199 = vmatpush1.msra.mxu0 %v142
    %200 = vmatprep.subr.mxu0 %v146
    %201 = vmatpush1.msra.mxu0 %v145
    %202 = vmatprep.subr.mxu0 %v149
    %203 = vmatpush1.msra.mxu0 %v148
    %204 = vmatprep.subr.mxu0 %v152
    %205 = vmatpush1.msra.mxu0 %v151
    %206 = vmatprep.subr.mxu0 %v155
    %207 = vmatpush1.msra.mxu0 %v154
    %208 = vmatprep.subr.mxu0 %v158
    %209 = vmatpush1.msra.mxu0 %v157
    %210 = vmatprep.subr.mxu0 %v161
    %211 = vmatpush1.msra.mxu0 %v160
    %212 = vmatprep.subr.mxu0 0.0
    %213 = vmatpush1.msra.mxu0 0.0
    %214 = vmatprep.subr.mxu0 0.0
    %215 = vmatpush1.msra.mxu0 0.0
    %216 = vmatprep.subr.mxu0 0.0
    %217 = vmatpush1.msra.mxu0 0.0
    %218 = vmatprep.subr.mxu0 0.0
    %219 = vmatpush1.msra.mxu0 0.0
    %220 = vmatprep.subr.mxu0 0.0
    %221 = vmatpush1.msra.mxu0 0.0
    %222 = vmatprep.subr.mxu0 0.0
    %223 = vmatpush1.msra.mxu0 0.0
    %224 = vmatprep.subr.mxu0 0.0
    %225 = vmatpush1.msra.mxu0 0.0
    %226 = vmatprep.subr.mxu0 0.0
    %227 = vmatpush1.msra.mxu0 0.0
    %228 = vmatprep.subr.mxu0 0.0
    %229 = vmatpush1.msra.mxu0 0.0
    %230 = vmatprep.subr.mxu0 0.0
    %231 = vmatpush1.msra.mxu0 0.0
    %232 = vmatprep.subr.mxu0 0.0
    %233 = vmatpush1.msra.mxu0 0.0
    %234 = vmatprep.subr.mxu0 0.0
    %235 = vmatpush1.msra.mxu0 0.0
    %236 = vmatprep.subr.mxu0 0.0
    %237 = vmatpush1.msra.mxu0 0.0
    %238 = vmatprep.subr.mxu0 0.0
    %239 = vmatpush1.msra.mxu0 0.0
    %240 = vmatprep.subr.mxu0 0.0
    %241 = vmatpush1.msra.mxu0 0.0
    %242 = vmatprep.subr.mxu0 0.0
    %243 = vmatpush1.msra.mxu0 0.0
    %244 = vmatprep.mubr.f32.mxu0 0.0
    %245 = vmatmul.mubr.f32.gmra.mrb[0].mxu0 %v93
    %v246 = vpop.f32.mrb[0].mxu0
    %v247 = vadd.f32 %v168, %v246
    %v248 = vpop.f32.mrb[0].mxu0
    %v249 = vadd.f32 %v172, %v248
    %250 = vdwg.mxu0
    %251 = vmatprep.subr.mxu0 0.0
    %252 = vmatpush1.msra.mxu0 %v117
    %253 = vmatprep.subr.mxu0 0.0
    %254 = vmatpush1.msra.mxu0 %v120
    %255 = vmatprep.subr.mxu0 0.0
    %256 = vmatpush1.msra.mxu0 %v123
    %257 = vmatprep.subr.mxu0 0.0
    %258 = vmatpush1.msra.mxu0 %v126
    %259 = vmatprep.subr.mxu0 0.0
    %260 = vmatpush1.msra.mxu0 %v129
    %261 = vmatprep.subr.mxu0 0.0
    %262 = vmatpush1.msra.mxu0 %v132
    %263 = vmatprep.subr.mxu0 0.0
    %264 = vmatpush1.msra.mxu0 %v135
    %265 = vmatprep.subr.mxu0 0.0
    %266 = vmatpush1.msra.mxu0 %v138
    %267 = vmatprep.subr.mxu0 0.0
    %268 = vmatpush1.msra.mxu0 %v141
    %269 = vmatprep.subr.mxu0 0.0
    %270 = vmatpush1.msra.mxu0 %v144
    %271 = vmatprep.subr.mxu0 0.0
    %272 = vmatpush1.msra.mxu0 %v147
    %273 = vmatprep.subr.mxu0 0.0
    %274 = vmatpush1.msra.mxu0 %v150
    %275 = vmatprep.subr.mxu0 0.0
    %276 = vmatpush1.msra.mxu0 %v153
    %277 = vmatprep.subr.mxu0 0.0
    %278 = vmatpush1.msra.mxu0 %v156
    %279 = vmatprep.subr.mxu0 0.0
    %280 = vmatpush1.msra.mxu0 %v159
    %281 = vmatprep.subr.mxu0 0.0
    %282 = vmatpush1.msra.mxu0 %v162
    %283 = vmatprep.subr.mxu0 0.0
    %284 = vmatpush1.msra.mxu0 0.0
    %285 = vmatprep.subr.mxu0 0.0
    %286 = vmatpush1.msra.mxu0 0.0
    %287 = vmatprep.subr.mxu0 0.0
    %288 = vmatpush1.msra.mxu0 0.0
    %289 = vmatprep.subr.mxu0 0.0
    %290 = vmatpush1.msra.mxu0 0.0
    %291 = vmatprep.subr.mxu0 0.0
    %292 = vmatpush1.msra.mxu0 0.0
    %293 = vmatprep.subr.mxu0 0.0
    %294 = vmatpush1.msra.mxu0 0.0
    %295 = vmatprep.subr.mxu0 0.0
    %296 = vmatpush1.msra.mxu0 0.0
    %297 = vmatprep.subr.mxu0 0.0
    %298 = vmatpush1.msra.mxu0 0.0
    %299 = vmatprep.subr.mxu0 0.0
    %300 = vmatpush1.msra.mxu0 0.0
    %301 = vmatprep.subr.mxu0 0.0
    %302 = vmatpush1.msra.mxu0 0.0
    %303 = vmatprep.subr.mxu0 0.0
    %304 = vmatpush1.msra.mxu0 0.0
    %305 = vmatprep.subr.mxu0 0.0
    %306 = vmatpush1.msra.mxu0 0.0
    %307 = vmatprep.subr.mxu0 0.0
    %308 = vmatpush1.msra.mxu0 0.0
    %309 = vmatprep.subr.mxu0 0.0
    %310 = vmatpush1.msra.mxu0 0.0
    %311 = vmatprep.subr.mxu0 0.0
    %312 = vmatpush1.msra.mxu0 0.0
    %313 = vmatprep.subr.mxu0 0.0
    %314 = vmatpush1.msra.mxu0 0.0
    %315 = vmatprep.mubr.f32.mxu0 0.0
    %316 = vmatmul.mubr.f32.gmra.mrb[0].mxu0 %v93
    %v317 = vpop.f32.mrb[0].mxu0
    %v318 = vadd.f32 %v176, %v317
    %v319 = vpop.f32.mrb[0].mxu0
    %320 = vdwg.mxu0
    %v321 = vadd.f32 %v114, %v247
    %v322 = vxor.u32 %v321, 2147483648
    %v323 = vmul.f32 %v322, 1.442695
    %v324 = vpow.pop %v323
    %v325 = vadd.f32 %v324, 1.0
    %v326 = vrcp.pop %v325
    %v327 = vmul.f32 1.0, %v326
    %v329 = vrot.slane %v114, 1
    %v331 = vadd.f32 %v329, %v249
    %v332 = vxor.u32 %v331, 2147483648
    %v333 = vmul.f32 %v332, 1.442695
    %v334 = vpow.pop %v333
    %v335 = vadd.f32 %v334, 1.0
    %v336 = vrcp.pop %v335
    %v337 = vmul.f32 1.0, %v336
    %v338 = vmul.f32 %v327, %v318
    %v339 = vrot.slane %v114, 2
    %v341 = vadd.f32 %v339, %v338
    %v342 = vtanh.pop %v341
    %v343 = vsub.f32 1.0, %v337
    %v344 = vmul.f32 %v343, %v342
    %v345 = vmul.f32 %v337, %v93
    %v346 = vadd.f32 %v344, %v345
    %347 = vst [vmem:[#allocation2] sm:$0x1] %v346
    %348 = vst [vmem:[#allocation3] sm:$0x1] %v346
    %v349 = vld [vmem:[#allocation3] sm:$0x1]
    %v350 = vld [vmem:[#allocation12] sm:$0xff]
    %v351 = vld [vmem:[#allocation12 + $0x8] sm:$0xff]
    %v352 = vld [vmem:[#allocation12 + $0x10] sm:$0xff]
    %v353 = vld [vmem:[#allocation12 + $0x18] sm:$0xff]
    %v354 = vld [vmem:[#allocation12 + $0x20] sm:$0xff]
    %v355 = vld [vmem:[#allocation12 + $0x28] sm:$0xff]
    %v356 = vld [vmem:[#allocation12 + $0x30] sm:$0xff]
    %v357 = vld [vmem:[#allocation12 + $0x38] sm:$0xff]
    %v358 = vld [vmem:[#allocation12 + $0x40] sm:$0xff]
    %v359 = vld [vmem:[#allocation12 + $0x48] sm:$0xff]
    %v360 = vld [vmem:[#allocation12 + $0x50] sm:$0xff]
    %v361 = vld [vmem:[#allocation12 + $0x58] sm:$0xff]
    %v362 = vld [vmem:[#allocation12 + $0x60] sm:$0xff]
    %v363 = vld [vmem:[#allocation12 + $0x68] sm:$0xff]
    %v364 = vld [vmem:[#allocation12 + $0x70] sm:$0xff]
    %v365 = vld [vmem:[#allocation12 + $0x78] sm:$0xff]
    %v366 = vld [vmem:[%s7] sm:$0x1]
    %367 = vmatprep.subr.mxu0 0.0
    %368 = vmatpush1.msra.mxu0 %v350
    %369 = vmatprep.subr.mxu0 0.0
    %370 = vmatpush1.msra.mxu0 %v351
    %371 = vmatprep.subr.mxu0 0.0
    %372 = vmatpush1.msra.mxu0 %v352
    %373 = vmatprep.subr.mxu0 0.0
    %374 = vmatpush1.msra.mxu0 %v353
    %375 = vmatprep.subr.mxu0 0.0
    %376 = vmatpush1.msra.mxu0 %v354
    %377 = vmatprep.subr.mxu0 0.0
    %378 = vmatpush1.msra.mxu0 %v355
    %379 = vmatprep.subr.mxu0 0.0
    %380 = vmatpush1.msra.mxu0 %v356
    %381 = vmatprep.subr.mxu0 0.0
    %382 = vmatpush1.msra.mxu0 %v357
    %383 = vmatprep.subr.mxu0 0.0
    %384 = vmatpush1.msra.mxu0 %v358
    %385 = vmatprep.subr.mxu0 0.0
    %386 = vmatpush1.msra.mxu0 %v359
    %387 = vmatprep.subr.mxu0 0.0
    %388 = vmatpush1.msra.mxu0 %v360
    %389 = vmatprep.subr.mxu0 0.0
    %390 = vmatpush1.msra.mxu0 %v361
    %391 = vmatprep.subr.mxu0 0.0
    %392 = vmatpush1.msra.mxu0 %v362
    %393 = vmatprep.subr.mxu0 0.0
    %394 = vmatpush1.msra.mxu0 %v363
    %395 = vmatprep.subr.mxu0 0.0
    %396 = vmatpush1.msra.mxu0 %v364
    %397 = vmatprep.subr.mxu0 0.0
    %398 = vmatpush1.msra.mxu0 %v365
    %399 = vmatprep.subr.mxu0 0.0
    %400 = vmatpush1.msra.mxu0 0.0
    %401 = vmatprep.subr.mxu0 0.0
    %402 = vmatpush1.msra.mxu0 0.0
    %403 = vmatprep.subr.mxu0 0.0
    %404 = vmatpush1.msra.mxu0 0.0
    %405 = vmatprep.subr.mxu0 0.0
    %406 = vmatpush1.msra.mxu0 0.0
    %407 = vmatprep.subr.mxu0 0.0
    %408 = vmatpush1.msra.mxu0 0.0
    %409 = vmatprep.subr.mxu0 0.0
    %410 = vmatpush1.msra.mxu0 0.0
    %411 = vmatprep.subr.mxu0 0.0
    %412 = vmatpush1.msra.mxu0 0.0
    %413 = vmatprep.subr.mxu0 0.0
    %414 = vmatpush1.msra.mxu0 0.0
    %415 = vmatprep.subr.mxu0 0.0
    %416 = vmatpush1.msra.mxu0 0.0
    %417 = vmatprep.subr.mxu0 0.0
    %418 = vmatpush1.msra.mxu0 0.0
    %419 = vmatprep.subr.mxu0 0.0
    %420 = vmatpush1.msra.mxu0 0.0
    %421 = vmatprep.subr.mxu0 0.0
    %422 = vmatpush1.msra.mxu0 0.0
    %423 = vmatprep.subr.mxu0 0.0
    %424 = vmatpush1.msra.mxu0 0.0
    %425 = vmatprep.subr.mxu0 0.0
    %426 = vmatpush1.msra.mxu0 0.0
    %427 = vmatprep.subr.mxu0 0.0
    %428 = vmatpush1.msra.mxu0 0.0
    %429 = vmatprep.subr.mxu0 0.0
    %430 = vmatpush1.msra.mxu0 0.0
    %431 = vmatprep.mubr.f32.mxu0 0.0
    %432 = vmatmul.mubr.f32.gmra.mrb[0].mxu0 %v349
    %v433 = vpop.f32.mrb[0].mxu0
    %v434 = vadd.f32 %v366, %v433
    %v435 = vpop.f32.mrb[0].mxu0
    %436 = vdwg.mxu0
    %vm437 = vcmask 1040384
    %v438 = vsel %vm437, %v434, -inf
    %439 = vmax.xlane.f32.xlu0 %v438
    %v440 = vpop.xlane.xlu0 %439
    %v441 = vsub.f32 %v434, %v440
    %v442 = vmul.f32 %v441, 1.442695
    %v443 = vpow.pop %v442
    %v444 = vsel %vm437, %v443, 0.0
    %445 = vadd.xlane.f32.xlu0 %v444
    %v446 = vpop.xlane.xlu0 %445
    %v447 = vlog2.pop %v446
    %v448 = vmul.f32 %v447, 0.6931472
    %v449 = vadd.f32 %v448, %v440
    %v450 = vsub.f32 %v434, %v449
    %451 = vst [vmem:[#allocation14] sm:$0x1] %v450
    %v452 = vld [vmem:[#allocation2] sm:$0x1]
    %453 = vst [vmem:[%s9] sm:$0x1] %v452
    // Predicated region
    $region46: #{decoder_decode.1} parent=1 // pred_check
      _
    $region47: #{decoder_decode.1} parent=1 // pred_check_branch
      %455 = sbr.rel (0) target = $region49
    $region48: #{decoder_decode.1} parent=1 // pred_region
      %s457 = ssub.s32 16, 16
      %458 = vsyncadd [#allocation8], %s457
      %s460 = sshll.u32 [#allocation14], 4
      %s461 = int_to_ptr.vmem [resolvable:$true] %s460
      %463 = dma.vmem_to_hbm [thread:$0]  %s461, 16, %s8, [#allocation8]
    $region49: #{decoder_decode.1} parent=1 // pred_fallthru
      _
    // Predicated region
    $region50: #{decoder_decode.1} parent=1 // pred_check
      _
    $region51: #{decoder_decode.1} parent=1 // pred_check_branch
      %465 = sbr.rel (0) target = $region53
    $region52: #{decoder_decode.1} parent=1 // pred_region
      _
    $region53: #{decoder_decode.1} parent=1 // pred_fallthru
      _
    // Predicated region
    $region54: #{decoder_decode.1} parent=1 // pred_check
      _
    $region55: #{decoder_decode.1} parent=1 // pred_check_branch
      %467 = sbr.rel (0) target = $region57
    $region56: #{decoder_decode.1} parent=1 // pred_region
      %468 = dma.done [#allocation8], 16
    $region57: #{decoder_decode.1} parent=1 // pred_fallthru
      _
    // Predicated region
    $region58: #{decoder_decode.1} parent=1 // pred_check
      _
    $region59: #{decoder_decode.1} parent=1 // pred_check_branch
      %470 = sbr.rel (0) target = $region61
    $region60: #{decoder_decode.1} parent=1 // pred_region
      _
    $region61: #{decoder_decode.1} parent=1 // pred_fallthru
      _
    %471 = vsyncpa [#allocation7], 1
    %472 = vsyncpa [#allocation10], 1
    %473 = vsyncpa [#allocation13], 1
    %474 = vsyncpa [#allocation8], 1

</llo_original>
